<compile_context>
chip_gen: v7x
topology: tpu7x:2x2x1
jax: 0.10.0
libtpu: 0.0.40
codegen_flags: <defaults>
</compile_context>

<pallas_src>
import jax
import jax.numpy as jnp
from jax.experimental import pallas as pl
from jax.experimental.pallas import tpu as pltpu

LANE = 128      # lane (last-dim) tile
SUBLANE = 8     # sublane (second-to-last dim) tile


def _round_up(x, m):
    return ((x + m - 1) // m) * m


def relunet_kernel(x_ref, w1_ref, b1_ref, w2_ref, b2_ref, wo_ref, bo_ref, out_ref):
    # x is unpadded (tile_b, n_input); all weights are 128-lane padded with
    # exact zeros, so the real output columns are identical to the unpadded
    # computation. All matmuls accumulate in f32 on the MXU.
    x = x_ref[...]
    # Hidden layer 1: Linear + ReLU
    h = jnp.dot(x, w1_ref[...], preferred_element_type=jnp.float32) + b1_ref[...]
    h = jnp.maximum(h, 0.0)
    # Hidden layer 2: Linear + ReLU
    h = jnp.dot(h, w2_ref[...], preferred_element_type=jnp.float32) + b2_ref[...]
    h = jnp.maximum(h, 0.0)
    # Output layer: lane-dense matmul against the padded wo, then store only the
    # real columns (tiny masked store; 128x less HBM writeback than padded out).
    y = jnp.dot(h, wo_ref[...], preferred_element_type=jnp.float32) + bo_ref[...]
    out_ref[...] = y[:, : out_ref.shape[1]].astype(out_ref.dtype)


def _choose_tile_b(batch, tile_b_max):
    """Pick a batch tile: multiple of 8, <= tile_b_max, and >=2 grid steps
    whenever the batch is large enough to split (v7x has 2 TensorCores)."""
    b8 = _round_up(batch, SUBLANE)
    tile = min(tile_b_max, b8)
    if tile == b8 and b8 >= 2 * SUBLANE:
        tile = _round_up(pl.cdiv(b8, 2), SUBLANE)
    return tile


def relunet_forward(x, padded_params, n_output, *, tile_b=1024):
    """x: (B, n_input) float array (unpadded). padded_params: dict of
    lane-padded weights/biases from init_params. Returns (B, n_output) f32."""
    p = padded_params
    B, n_in = x.shape
    assert p["w1"].shape[0] == n_in
    hid_pad = p["w1"].shape[1]
    out_pad = p["wo"].shape[1]

    x = x.astype(jnp.float32)

    tb = _choose_tile_b(B, tile_b)
    grid = (pl.cdiv(B, tb),)

    # Rough VMEM estimate: x/out double buffers + ~4 live (tb,128) f32
    # intermediates (everything lane-pads to 128 in VMEM) + resident weights.
    est_vmem = tb * LANE * 4 * 8 + 2 * (160 * 1024)
    vmem_limit = int(est_vmem * 5 // 4) if est_vmem > (16 << 20) else None

    def resident(shape):
        # Constant index_map: fetched once, stays VMEM-resident across steps.
        return pl.BlockSpec(shape, lambda i: (0, 0))

    out = pl.pallas_call(
        relunet_kernel,
        out_shape=jax.ShapeDtypeStruct((B, n_output), jnp.float32),
        grid=grid,
        in_specs=[
            pl.BlockSpec((tb, n_in), lambda i: (i, 0)),   # x (unpadded features)
            resident((n_in, hid_pad)),                    # w1
            resident((1, hid_pad)),                       # b1
            resident((hid_pad, hid_pad)),                 # w2
            resident((1, hid_pad)),                       # b2
            resident((hid_pad, out_pad)),                 # wo (lane-padded)
            resident((1, out_pad)),                       # bo (lane-padded)
        ],
        out_specs=pl.BlockSpec((tb, n_output), lambda i: (i, 0)),
        compiler_params=pltpu.CompilerParams(
            dimension_semantics=("parallel",),            # shard batch across TCs (v7x)
            vmem_limit_bytes=vmem_limit,
        ),
    )(x, p["w1"], p["b1"], p["w2"], p["b2"], p["wo"], p["bo"])

    return out


def init_params(key, n_input, n_hidden, n_output):
    """PyTorch-style uniform(-1/sqrt(fan_in), 1/sqrt(fan_in)) init.

    Returns (raw_params, padded_params). Weights are stored (in, out), i.e.
    already transposed relative to torch. Padded params zero-pad only the
    feature (lane) dims to 128; padded regions are exactly zero so they cannot
    contaminate the real output columns. The input dim of w1 is NOT padded
    (x is consumed unpadded)."""
    def linear(key, fan_in, fan_out):
        kw, kb = jax.random.split(key)
        bound = 1.0 / jnp.sqrt(jnp.float32(fan_in))
        w = jax.random.uniform(kw, (fan_in, fan_out), jnp.float32, -bound, bound)
        b = jax.random.uniform(kb, (1, fan_out), jnp.float32, -bound, bound)
        return w, b

    k1, k2, k3 = jax.random.split(key, 3)
    w1, b1 = linear(k1, n_input, n_hidden)    # hidden_layers[0]
    w2, b2 = linear(k2, n_hidden, n_hidden)   # hidden_layers[1]
    wo, bo = linear(k3, n_hidden, n_output)   # output
    raw = {"w1": w1, "b1": b1, "w2": w2, "b2": b2, "wo": wo, "bo": bo}

    hid_pad = _round_up(n_hidden, LANE)
    out_pad = _round_up(n_output, LANE)

    def pad2(a, r, c):
        return jnp.zeros((r, c), jnp.float32).at[: a.shape[0], : a.shape[1]].set(a)

    padded = {
        "w1": pad2(w1, n_input, hid_pad),     # input dim left unpadded
        "b1": pad2(b1, 1, hid_pad),
        "w2": pad2(w2, hid_pad, hid_pad),
        "b2": pad2(b2, 1, hid_pad),
        "wo": pad2(wo, hid_pad, out_pad),
        "bo": pad2(bo, 1, out_pad),
    }
    return raw, padded


def reference_forward(x, p):
    h = jnp.maximum(x @ p["w1"] + p["b1"], 0.0)
    h = jnp.maximum(h @ p["w2"] + p["b2"], 0.0)
    return h @ p["wo"] + p["bo"]


if __name__ == "__main__":
    # Module config implied by the script: n_input = len(space) = 7,
    # n_output = 1 (single surrogate objective), num_layers = 2 hidden layers.
    n_input, n_hidden, n_output = 7, 32, 1

    key = jax.random.PRNGKey(0)
    kp, kx1, kx2 = jax.random.split(key, 3)
    raw_params, padded_params = init_params(kp, n_input, n_hidden, n_output)

    # Small aligned batch.
    batch = 8
    x = jax.random.normal(kx1, (batch, n_input), dtype=jnp.float32)
    out = jax.block_until_ready(relunet_forward(x, padded_params, n_output))
    ref = reference_forward(x, raw_params)
    assert out.shape == (batch, n_output)
    assert jnp.allclose(out, ref, atol=1e-5, rtol=1e-5)

    # Ragged batch: exercises the masked boundary block (no wrapper-side pad).
    batch2 = 13
    x2 = jax.random.normal(kx2, (batch2, n_input), dtype=jnp.float32)
    out2 = jax.block_until_ready(relunet_forward(x2, padded_params, n_output))
    ref2 = reference_forward(x2, raw_params)
    assert out2.shape == (batch2, n_output)
    assert jnp.allclose(out2, ref2, atol=1e-5, rtol=1e-5)

    print("KERNEL_OK")
</pallas_src>

<mosaic_0001>
module attributes {stable_mosaic.version = 11 : i64} {
  func.func @relunet_kernel(%arg0: i32, %arg1: memref<8x7xf32, #tpu.memory_space<vmem>>, %arg2: memref<7x128xf32, #tpu.memory_space<vmem>>, %arg3: memref<1x128xf32, #tpu.memory_space<vmem>>, %arg4: memref<128x128xf32, #tpu.memory_space<vmem>>, %arg5: memref<1x128xf32, #tpu.memory_space<vmem>>, %arg6: memref<128x128xf32, #tpu.memory_space<vmem>>, %arg7: memref<1x128xf32, #tpu.memory_space<vmem>>, %arg8: memref<8x1xf32, #tpu.memory_space<vmem>>) attributes {dimension_semantics = [#tpu.dimension_semantics<parallel>], iteration_bounds = array<i64: 1>, scalar_prefetch = 0 : i64, scratch_operands = 0 : i64, tpu.core_type = #tpu.core_type<tc>, window_params = [{transform_indices = @transform_0, window_bounds = array<i64: 8, 7>}, {pipeline_mode = #tpu.pipeline_mode<synchronous>, transform_indices = @transform_1, window_bounds = array<i64: 7, 128>}, {pipeline_mode = #tpu.pipeline_mode<synchronous>, transform_indices = @transform_2, window_bounds = array<i64: 1, 128>}, {pipeline_mode = #tpu.pipeline_mode<synchronous>, transform_indices = @transform_3, window_bounds = array<i64: 128, 128>}, {pipeline_mode = #tpu.pipeline_mode<synchronous>, transform_indices = @transform_4, window_bounds = array<i64: 1, 128>}, {pipeline_mode = #tpu.pipeline_mode<synchronous>, transform_indices = @transform_5, window_bounds = array<i64: 128, 128>}, {pipeline_mode = #tpu.pipeline_mode<synchronous>, transform_indices = @transform_6, window_bounds = array<i64: 1, 128>}, {transform_indices = @transform_7, window_bounds = array<i64: 8, 1>}]} {
    %c0 = arith.constant 0 : index
    %c0_0 = arith.constant 0 : index
    %0 = vector.load %arg1[%c0, %c0_0] : memref<8x7xf32, #tpu.memory_space<vmem>>, vector<8x7xf32>
    %c0_1 = arith.constant 0 : index
    %c0_2 = arith.constant 0 : index
    %1 = vector.load %arg2[%c0_1, %c0_2] : memref<7x128xf32, #tpu.memory_space<vmem>>, vector<7x128xf32>
    %cst = arith.constant dense<0.000000e+00> : vector<8x128xf32>
    %2 = tpu.matmul %0, %1, %cst {dimension_numbers = #tpu.dot_dimension_numbers<[1], [0], [0], [1], [0, 0, 1, 1], [], []>} : vector<8x7xf32>, vector<7x128xf32>, vector<8x128xf32> -> vector<8x128xf32>
    %c0_3 = arith.constant 0 : index
    %c0_4 = arith.constant 0 : index
    %3 = vector.load %arg3[%c0_3, %c0_4] : memref<1x128xf32, #tpu.memory_space<vmem>>, vector<1x128xf32>
    %4 = vector.broadcast %3 : vector<1x128xf32> to vector<8x128xf32>
    %5 = arith.addf %2, %4 : vector<8x128xf32>
    %cst_5 = arith.constant 0.000000e+00 : f32
    %6 = vector.broadcast %cst_5 : f32 to vector<8x128xf32>
    %7 = arith.maximumf %5, %6 : vector<8x128xf32>
    %c0_6 = arith.constant 0 : index
    %c0_7 = arith.constant 0 : index
    %8 = vector.load %arg4[%c0_6, %c0_7] : memref<128x128xf32, #tpu.memory_space<vmem>>, vector<128x128xf32>
    %cst_8 = arith.constant dense<0.000000e+00> : vector<8x128xf32>
    %9 = tpu.matmul %7, %8, %cst_8 {dimension_numbers = #tpu.dot_dimension_numbers<[1], [0], [0], [1], [0, 0, 1, 1], [], []>} : vector<8x128xf32>, vector<128x128xf32>, vector<8x128xf32> -> vector<8x128xf32>
    %c0_9 = arith.constant 0 : index
    %c0_10 = arith.constant 0 : index
    %10 = vector.load %arg5[%c0_9, %c0_10] : memref<1x128xf32, #tpu.memory_space<vmem>>, vector<1x128xf32>
    %11 = vector.broadcast %10 : vector<1x128xf32> to vector<8x128xf32>
    %12 = arith.addf %9, %11 : vector<8x128xf32>
    %cst_11 = arith.constant 0.000000e+00 : f32
    %13 = vector.broadcast %cst_11 : f32 to vector<8x128xf32>
    %14 = arith.maximumf %12, %13 : vector<8x128xf32>
    %c0_12 = arith.constant 0 : index
    %c0_13 = arith.constant 0 : index
    %15 = vector.load %arg6[%c0_12, %c0_13] : memref<128x128xf32, #tpu.memory_space<vmem>>, vector<128x128xf32>
    %cst_14 = arith.constant dense<0.000000e+00> : vector<8x128xf32>
    %16 = tpu.matmul %14, %15, %cst_14 {dimension_numbers = #tpu.dot_dimension_numbers<[1], [0], [0], [1], [0, 0, 1, 1], [], []>} : vector<8x128xf32>, vector<128x128xf32>, vector<8x128xf32> -> vector<8x128xf32>
    %c0_15 = arith.constant 0 : index
    %c0_16 = arith.constant 0 : index
    %17 = vector.load %arg7[%c0_15, %c0_16] : memref<1x128xf32, #tpu.memory_space<vmem>>, vector<1x128xf32>
    %18 = vector.broadcast %17 : vector<1x128xf32> to vector<8x128xf32>
    %19 = arith.addf %16, %18 : vector<8x128xf32>
    %20 = vector.extract_strided_slice %19 {offsets = [0, 0], sizes = [8, 1], strides = [1, 1]} : vector<8x128xf32> to vector<8x1xf32>
    %c0_17 = arith.constant 0 : index
    %c0_18 = arith.constant 0 : index
    %21 = vector.load %arg8[%c0_17, %c0_18] : memref<8x1xf32, #tpu.memory_space<vmem>>, vector<8x1xf32>
    tpu.vector_store %arg8[%c0_17, %c0_18], %20 {strides = array<i32>} : memref<8x1xf32, #tpu.memory_space<vmem>>, vector<8x1xf32>,
    return
  }
  func.func @transform_0(%arg0: i32) -> (i32, i32) {
    %c0_i32 = arith.constant 0 : i32
    %c0_i32_0 = arith.constant 0 : i32
    return %arg0, %c0_i32 : i32, i32
  }
  func.func @transform_1(%arg0: i32) -> (i32, i32) {
    %c0_i32 = arith.constant 0 : i32
    %c0_i32_0 = arith.constant 0 : i32
    %c0_i32_1 = arith.constant 0 : i32
    return %c0_i32, %c0_i32_0 : i32, i32
  }
  func.func @transform_2(%arg0: i32) -> (i32, i32) {
    %c0_i32 = arith.constant 0 : i32
    %c0_i32_0 = arith.constant 0 : i32
    %c0_i32_1 = arith.constant 0 : i32
    return %c0_i32, %c0_i32_0 : i32, i32
  }
  func.func @transform_3(%arg0: i32) -> (i32, i32) {
    %c0_i32 = arith.constant 0 : i32
    %c0_i32_0 = arith.constant 0 : i32
    %c0_i32_1 = arith.constant 0 : i32
    return %c0_i32, %c0_i32_0 : i32, i32
  }
  func.func @transform_4(%arg0: i32) -> (i32, i32) {
    %c0_i32 = arith.constant 0 : i32
    %c0_i32_0 = arith.constant 0 : i32
    %c0_i32_1 = arith.constant 0 : i32
    return %c0_i32, %c0_i32_0 : i32, i32
  }
  func.func @transform_5(%arg0: i32) -> (i32, i32) {
    %c0_i32 = arith.constant 0 : i32
    %c0_i32_0 = arith.constant 0 : i32
    %c0_i32_1 = arith.constant 0 : i32
    return %c0_i32, %c0_i32_0 : i32, i32
  }
  func.func @transform_6(%arg0: i32) -> (i32, i32) {
    %c0_i32 = arith.constant 0 : i32
    %c0_i32_0 = arith.constant 0 : i32
    %c0_i32_1 = arith.constant 0 : i32
    return %c0_i32, %c0_i32_0 : i32, i32
  }
  func.func @transform_7(%arg0: i32) -> (i32, i32) {
    %c0_i32 = arith.constant 0 : i32
    %c0_i32_0 = arith.constant 0 : i32
    return %arg0, %c0_i32 : i32, i32
  }
}

</mosaic_0001>

<llo_original>
// kernel: tpu_custom_call.1
$region0: #{tpu_custom_call.1}
  #allocation0 [shape = 'u32[]', space=smem, size = 0x4, offset = 0x4, fixed_abs, tag = 'smem constant byte address 0x4 - core index']
  #allocation1 [shape = 'u32[144,128]{1,0:T(1,128)}', space=vmem, size = 0x12000, scoped, tag = 'internal scratch']
  %s0 = inlined_call_operand.hbm [shape: f32[8,7], index: 0, kind: input, shape index: {}]
  %s1 = inlined_call_operand.hbm [shape: f32[7,128], index: 1, kind: input, shape index: {}]
  %s2 = inlined_call_operand.vmem [shape: f32[1,128], index: 2, kind: input, shape index: {}]
  %s3 = inlined_call_operand.hbm [shape: f32[128,128], index: 3, kind: input, shape index: {}]
  %s4 = inlined_call_operand.vmem [shape: f32[1,128], index: 4, kind: input, shape index: {}]
  %s5 = inlined_call_operand.hbm [shape: f32[128,128], index: 5, kind: input, shape index: {}]
  %s6 = inlined_call_operand.vmem [shape: f32[1,128], index: 6, kind: input, shape index: {}]
  %s7 = inlined_call_operand.vmem [shape: f32[8,1], index: 7, kind: output, shape index: {}]
  %s8 = sld [smem:[#allocation0]]
  $region54: #{tpu_custom_call.1} parent=0
    _
  %s10 = ssub.s32 1, %s8
  %s11 = scalar_select 0, %s10, %s8
  $region1: #{tpu_custom_call.1} parent=0
    #allocation2 [shape = 'u8[4096]{0}', space=vmem, size = 0x1000, scoped, tag = 'input window, operand 0, single buffered']
    #allocation3 [shape = 's32[1]{0}', space=sflag, size = 0x4, scoped, tag = 'scoped memory for tpu_custom_call.1']
    #allocation4 [shape = 'u8[4096]{0}', space=vmem, size = 0x1000, scoped, tag = 'input window, operand 1, single buffered']
    #allocation5 [shape = 's32[1]{0}', space=sflag, size = 0x4, scoped, tag = 'scoped memory for tpu_custom_call.1']
    #allocation6 [shape = 'u8[65536]{0}', space=vmem, size = 0x10000, scoped, tag = 'input window, operand 3, single buffered']
    #allocation7 [shape = 'u8[65536]{0}', space=vmem, size = 0x10000, scoped, tag = 'input window, operand 5, single buffered']
    #allocation8 [shape = 's32[1]{0}', space=sflag, size = 0x4, scoped, tag = 'scoped memory for tpu_custom_call.1']
    %12 = vsyncpa [#allocation3], 0
    %13 = vsyncpa [#allocation5], 0
    %14 = vsyncpa [#allocation8], 0
    // Predicated region
    $region2: #{tpu_custom_call.1} parent=1 // pred_check
      _
    $region3: #{tpu_custom_call.1} parent=1 // pred_check_branch
      %16 = sbr.rel (0) target = $region5
    $region4: #{tpu_custom_call.1} parent=1 // pred_region
      %s18 = ssub.s32 128, 128
      %19 = vsyncadd [#allocation3], %s18
      %s21 = sshll.u32 [#allocation2], 4
      %s22 = int_to_ptr.vmem [resolvable:$true] %s21
      %24 = dma.hbm_to_vmem [thread:$0]  %s0, 128, %s22, [#allocation3]
    $region5: #{tpu_custom_call.1} parent=1 // pred_fallthru
      _
    // Predicated region
    $region6: #{tpu_custom_call.1} parent=1 // pred_check
      _
    $region7: #{tpu_custom_call.1} parent=1 // pred_check_branch
      %26 = sbr.rel (0) target = $region9
    $region8: #{tpu_custom_call.1} parent=1 // pred_region
      %s28 = ssub.s32 128, 128
      %29 = vsyncadd [#allocation5], %s28
      %s31 = sshll.u32 [#allocation4], 4
      %s32 = int_to_ptr.vmem [resolvable:$true] %s31
      %34 = dma.hbm_to_vmem [thread:$0]  %s1, 128, %s32, [#allocation5]
    $region9: #{tpu_custom_call.1} parent=1 // pred_fallthru
      _
    // Predicated region
    $region10: #{tpu_custom_call.1} parent=1 // pred_check
      _
    $region11: #{tpu_custom_call.1} parent=1 // pred_check_branch
      %36 = sbr.rel (0) target = $region13
    $region12: #{tpu_custom_call.1} parent=1 // pred_region
      _
    $region13: #{tpu_custom_call.1} parent=1 // pred_fallthru
      _
    // Predicated region
    $region14: #{tpu_custom_call.1} parent=1 // pred_check
      _
    $region15: #{tpu_custom_call.1} parent=1 // pred_check_branch
      %38 = sbr.rel (0) target = $region17
    $region16: #{tpu_custom_call.1} parent=1 // pred_region
      %s40 = ssub.s32 2048, 2048
      %41 = vsyncadd [#allocation5], %s40
      %s42 = sshll.u32 [#allocation6], 4
      %s43 = int_to_ptr.vmem [resolvable:$true] %s42
      %48 = dma.hbm_to_vmem [thread:$0]  %s3, 2048, %s43, [#allocation5], 128, 128, 8
    $region17: #{tpu_custom_call.1} parent=1 // pred_fallthru
      _
    // Predicated region
    $region18: #{tpu_custom_call.1} parent=1 // pred_check
      _
    $region19: #{tpu_custom_call.1} parent=1 // pred_check_branch
      %50 = sbr.rel (0) target = $region21
    $region20: #{tpu_custom_call.1} parent=1 // pred_region
      _
    $region21: #{tpu_custom_call.1} parent=1 // pred_fallthru
      _
    // Predicated region
    $region22: #{tpu_custom_call.1} parent=1 // pred_check
      _
    $region23: #{tpu_custom_call.1} parent=1 // pred_check_branch
      %52 = sbr.rel (0) target = $region25
    $region24: #{tpu_custom_call.1} parent=1 // pred_region
      %s54 = ssub.s32 2048, 2048
      %55 = vsyncadd [#allocation8], %s54
      %s56 = sshll.u32 [#allocation7], 4
      %s57 = int_to_ptr.vmem [resolvable:$true] %s56
      %62 = dma.hbm_to_vmem [thread:$0]  %s5, 2048, %s57, [#allocation8], 128, 128, 8
    $region25: #{tpu_custom_call.1} parent=1 // pred_fallthru
      _
    // Predicated region
    $region26: #{tpu_custom_call.1} parent=1 // pred_check
      _
    $region27: #{tpu_custom_call.1} parent=1 // pred_check_branch
      %64 = sbr.rel (0) target = $region29
    $region28: #{tpu_custom_call.1} parent=1 // pred_region
      _
    $region29: #{tpu_custom_call.1} parent=1 // pred_fallthru
      _
    // Predicated region
    $region30: #{tpu_custom_call.1} parent=1 // pred_check
      _
    $region31: #{tpu_custom_call.1} parent=1 // pred_check_branch
      %66 = sbr.rel (0) target = $region33
    $region32: #{tpu_custom_call.1} parent=1 // pred_region
      %67 = dma.done [#allocation3], 128
    $region33: #{tpu_custom_call.1} parent=1 // pred_fallthru
      _
    // Predicated region
    $region34: #{tpu_custom_call.1} parent=1 // pred_check
      _
    $region35: #{tpu_custom_call.1} parent=1 // pred_check_branch
      %69 = sbr.rel (0) target = $region37
    $region36: #{tpu_custom_call.1} parent=1 // pred_region
      %70 = dma.done [#allocation5], 128
    $region37: #{tpu_custom_call.1} parent=1 // pred_fallthru
      _
    // Predicated region
    $region38: #{tpu_custom_call.1} parent=1 // pred_check
      _
    $region39: #{tpu_custom_call.1} parent=1 // pred_check_branch
      %72 = sbr.rel (0) target = $region41
    $region40: #{tpu_custom_call.1} parent=1 // pred_region
      %73 = dma.done [#allocation5], 2048
    $region41: #{tpu_custom_call.1} parent=1 // pred_fallthru
      _
    // Predicated region
    $region42: #{tpu_custom_call.1} parent=1 // pred_check
      _
    $region43: #{tpu_custom_call.1} parent=1 // pred_check_branch
      %75 = sbr.rel (0) target = $region45
    $region44: #{tpu_custom_call.1} parent=1 // pred_region
      %76 = dma.done [#allocation8], 2048
    $region45: #{tpu_custom_call.1} parent=1 // pred_fallthru
      _
    %v77 = vld [vmem:[#allocation2] sm:$0xff]
    %v78 = vld [vmem:[#allocation4] sm:$0x7f]
    %v79 = vld [vmem:[%s2] sm:$0x1]
    %v81 = vlaneseq
    %v82 = vshrl.u32 %v81, 7
    %v83 = vsub.s32 0, %v82
    %v84 = vrot.slane %v79, %v83
    %vm86 = vcmask 56320
    %v88 = vsel %vm86, %v77, 0
    %vm90 = vcmask 1046528
    %v92 = vsel %vm90, %v78, 0
    %94 = vmatprep.subr.mxu0 0.0
    %95 = vmatpush1.msra.mxu0 %v92
    %96 = vmatprep.subr.mxu0 0.0
    %97 = vmatpush1.msra.mxu0 0.0
    %98 = vmatprep.subr.mxu0 0.0
    %99 = vmatpush1.msra.mxu0 0.0
    %100 = vmatprep.subr.mxu0 0.0
    %101 = vmatpush1.msra.mxu0 0.0
    %102 = vmatprep.subr.mxu0 0.0
    %103 = vmatpush1.msra.mxu0 0.0
    %104 = vmatprep.subr.mxu0 0.0
    %105 = vmatpush1.msra.mxu0 0.0
    %106 = vmatprep.subr.mxu0 0.0
    %107 = vmatpush1.msra.mxu0 0.0
    %108 = vmatprep.subr.mxu0 0.0
    %109 = vmatpush1.msra.mxu0 0.0
    %110 = vmatprep.subr.mxu0 0.0
    %111 = vmatpush1.msra.mxu0 0.0
    %112 = vmatprep.subr.mxu0 0.0
    %113 = vmatpush1.msra.mxu0 0.0
    %114 = vmatprep.subr.mxu0 0.0
    %115 = vmatpush1.msra.mxu0 0.0
    %116 = vmatprep.subr.mxu0 0.0
    %117 = vmatpush1.msra.mxu0 0.0
    %118 = vmatprep.subr.mxu0 0.0
    %119 = vmatpush1.msra.mxu0 0.0
    %120 = vmatprep.subr.mxu0 0.0
    %121 = vmatpush1.msra.mxu0 0.0
    %122 = vmatprep.subr.mxu0 0.0
    %123 = vmatpush1.msra.mxu0 0.0
    %124 = vmatprep.subr.mxu0 0.0
    %125 = vmatpush1.msra.mxu0 0.0
    %126 = vmatprep.subr.mxu0 0.0
    %127 = vmatpush1.msra.mxu0 0.0
    %128 = vmatprep.subr.mxu0 0.0
    %129 = vmatpush1.msra.mxu0 0.0
    %130 = vmatprep.subr.mxu0 0.0
    %131 = vmatpush1.msra.mxu0 0.0
    %132 = vmatprep.subr.mxu0 0.0
    %133 = vmatpush1.msra.mxu0 0.0
    %134 = vmatprep.subr.mxu0 0.0
    %135 = vmatpush1.msra.mxu0 0.0
    %136 = vmatprep.subr.mxu0 0.0
    %137 = vmatpush1.msra.mxu0 0.0
    %138 = vmatprep.subr.mxu0 0.0
    %139 = vmatpush1.msra.mxu0 0.0
    %140 = vmatprep.subr.mxu0 0.0
    %141 = vmatpush1.msra.mxu0 0.0
    %142 = vmatprep.subr.mxu0 0.0
    %143 = vmatpush1.msra.mxu0 0.0
    %144 = vmatprep.subr.mxu0 0.0
    %145 = vmatpush1.msra.mxu0 0.0
    %146 = vmatprep.subr.mxu0 0.0
    %147 = vmatpush1.msra.mxu0 0.0
    %148 = vmatprep.subr.mxu0 0.0
    %149 = vmatpush1.msra.mxu0 0.0
    %150 = vmatprep.subr.mxu0 0.0
    %151 = vmatpush1.msra.mxu0 0.0
    %152 = vmatprep.subr.mxu0 0.0
    %153 = vmatpush1.msra.mxu0 0.0
    %154 = vmatprep.subr.mxu0 0.0
    %155 = vmatpush1.msra.mxu0 0.0
    %156 = vmatprep.subr.mxu0 0.0
    %157 = vmatpush1.msra.mxu0 0.0
    %158 = vmatprep.mubr.f32.mxu0 0.0
    %159 = vmatmul.mubr.f32.gmra.mrb[0].mxu0 %v88
    %v160 = vpop.f32.mrb[0].mxu0
    %v161 = vadd.f32 %v84, %v160
    %v162 = vpop.f32.mrb[0].mxu0
    %163 = vdwg.mxu0
    %v164 = vmax.f32 %v161, 0.0
    %v165 = vld [vmem:[#allocation6] sm:$0xff]
    %v166 = vld [vmem:[#allocation6 + $0x8] sm:$0xff]
    %v167 = vld [vmem:[#allocation6 + $0x10] sm:$0xff]
    %v168 = vld [vmem:[#allocation6 + $0x18] sm:$0xff]
    %v169 = vld [vmem:[#allocation6 + $0x20] sm:$0xff]
    %v170 = vld [vmem:[#allocation6 + $0x28] sm:$0xff]
    %v171 = vld [vmem:[#allocation6 + $0x30] sm:$0xff]
    %v172 = vld [vmem:[#allocation6 + $0x38] sm:$0xff]
    %v173 = vld [vmem:[#allocation6 + $0x40] sm:$0xff]
    %v174 = vld [vmem:[#allocation6 + $0x48] sm:$0xff]
    %v175 = vld [vmem:[#allocation6 + $0x50] sm:$0xff]
    %v176 = vld [vmem:[#allocation6 + $0x58] sm:$0xff]
    %v177 = vld [vmem:[#allocation6 + $0x60] sm:$0xff]
    %v178 = vld [vmem:[#allocation6 + $0x68] sm:$0xff]
    %v179 = vld [vmem:[#allocation6 + $0x70] sm:$0xff]
    %v180 = vld [vmem:[#allocation6 + $0x78] sm:$0xff]
    %v181 = vld [vmem:[%s4] sm:$0x1]
    %v183 = vlaneseq
    %v184 = vshrl.u32 %v183, 7
    %v185 = vsub.s32 0, %v184
    %v186 = vrot.slane %v181, %v185
    %188 = vmatprep.subr.mxu0 0.0
    %189 = vmatpush1.msra.mxu0 %v165
    %190 = vmatprep.subr.mxu0 0.0
    %191 = vmatpush1.msra.mxu0 %v166
    %192 = vmatprep.subr.mxu0 0.0
    %193 = vmatpush1.msra.mxu0 %v167
    %194 = vmatprep.subr.mxu0 0.0
    %195 = vmatpush1.msra.mxu0 %v168
    %196 = vmatprep.subr.mxu0 0.0
    %197 = vmatpush1.msra.mxu0 %v169
    %198 = vmatprep.subr.mxu0 0.0
    %199 = vmatpush1.msra.mxu0 %v170
    %200 = vmatprep.subr.mxu0 0.0
    %201 = vmatpush1.msra.mxu0 %v171
    %202 = vmatprep.subr.mxu0 0.0
    %203 = vmatpush1.msra.mxu0 %v172
    %204 = vmatprep.subr.mxu0 0.0
    %205 = vmatpush1.msra.mxu0 %v173
    %206 = vmatprep.subr.mxu0 0.0
    %207 = vmatpush1.msra.mxu0 %v174
    %208 = vmatprep.subr.mxu0 0.0
    %209 = vmatpush1.msra.mxu0 %v175
    %210 = vmatprep.subr.mxu0 0.0
    %211 = vmatpush1.msra.mxu0 %v176
    %212 = vmatprep.subr.mxu0 0.0
    %213 = vmatpush1.msra.mxu0 %v177
    %214 = vmatprep.subr.mxu0 0.0
    %215 = vmatpush1.msra.mxu0 %v178
    %216 = vmatprep.subr.mxu0 0.0
    %217 = vmatpush1.msra.mxu0 %v179
    %218 = vmatprep.subr.mxu0 0.0
    %219 = vmatpush1.msra.mxu0 %v180
    %220 = vmatprep.subr.mxu0 0.0
    %221 = vmatpush1.msra.mxu0 0.0
    %222 = vmatprep.subr.mxu0 0.0
    %223 = vmatpush1.msra.mxu0 0.0
    %224 = vmatprep.subr.mxu0 0.0
    %225 = vmatpush1.msra.mxu0 0.0
    %226 = vmatprep.subr.mxu0 0.0
    %227 = vmatpush1.msra.mxu0 0.0
    %228 = vmatprep.subr.mxu0 0.0
    %229 = vmatpush1.msra.mxu0 0.0
    %230 = vmatprep.subr.mxu0 0.0
    %231 = vmatpush1.msra.mxu0 0.0
    %232 = vmatprep.subr.mxu0 0.0
    %233 = vmatpush1.msra.mxu0 0.0
    %234 = vmatprep.subr.mxu0 0.0
    %235 = vmatpush1.msra.mxu0 0.0
    %236 = vmatprep.subr.mxu0 0.0
    %237 = vmatpush1.msra.mxu0 0.0
    %238 = vmatprep.subr.mxu0 0.0
    %239 = vmatpush1.msra.mxu0 0.0
    %240 = vmatprep.subr.mxu0 0.0
    %241 = vmatpush1.msra.mxu0 0.0
    %242 = vmatprep.subr.mxu0 0.0
    %243 = vmatpush1.msra.mxu0 0.0
    %244 = vmatprep.subr.mxu0 0.0
    %245 = vmatpush1.msra.mxu0 0.0
    %246 = vmatprep.subr.mxu0 0.0
    %247 = vmatpush1.msra.mxu0 0.0
    %248 = vmatprep.subr.mxu0 0.0
    %249 = vmatpush1.msra.mxu0 0.0
    %250 = vmatprep.subr.mxu0 0.0
    %251 = vmatpush1.msra.mxu0 0.0
    %252 = vmatprep.mubr.f32.mxu0 0.0
    %253 = vmatmul.mubr.f32.gmra.mrb[0].mxu0 %v164
    %v254 = vpop.f32.mrb[0].mxu0
    %v255 = vadd.f32 %v186, %v254
    %v256 = vpop.f32.mrb[0].mxu0
    %257 = vdwg.mxu0
    %v258 = vmax.f32 %v255, 0.0
    %v259 = vld [vmem:[#allocation7] sm:$0xff]
    %v260 = vld [vmem:[#allocation7 + $0x8] sm:$0xff]
    %v261 = vld [vmem:[#allocation7 + $0x10] sm:$0xff]
    %v262 = vld [vmem:[#allocation7 + $0x18] sm:$0xff]
    %v263 = vld [vmem:[#allocation7 + $0x20] sm:$0xff]
    %v264 = vld [vmem:[#allocation7 + $0x28] sm:$0xff]
    %v265 = vld [vmem:[#allocation7 + $0x30] sm:$0xff]
    %v266 = vld [vmem:[#allocation7 + $0x38] sm:$0xff]
    %v267 = vld [vmem:[#allocation7 + $0x40] sm:$0xff]
    %v268 = vld [vmem:[#allocation7 + $0x48] sm:$0xff]
    %v269 = vld [vmem:[#allocation7 + $0x50] sm:$0xff]
    %v270 = vld [vmem:[#allocation7 + $0x58] sm:$0xff]
    %v271 = vld [vmem:[#allocation7 + $0x60] sm:$0xff]
    %v272 = vld [vmem:[#allocation7 + $0x68] sm:$0xff]
    %v273 = vld [vmem:[#allocation7 + $0x70] sm:$0xff]
    %v274 = vld [vmem:[#allocation7 + $0x78] sm:$0xff]
    %v275 = vld [vmem:[%s6] sm:$0x1]
    %v277 = vlaneseq
    %v278 = vshrl.u32 %v277, 7
    %v279 = vsub.s32 0, %v278
    %v280 = vrot.slane %v275, %v279
    %282 = vmatprep.subr.mxu0 0.0
    %283 = vmatpush1.msra.mxu0 %v259
    %284 = vmatprep.subr.mxu0 0.0
    %285 = vmatpush1.msra.mxu0 %v260
    %286 = vmatprep.subr.mxu0 0.0
    %287 = vmatpush1.msra.mxu0 %v261
    %288 = vmatprep.subr.mxu0 0.0
    %289 = vmatpush1.msra.mxu0 %v262
    %290 = vmatprep.subr.mxu0 0.0
    %291 = vmatpush1.msra.mxu0 %v263
    %292 = vmatprep.subr.mxu0 0.0
    %293 = vmatpush1.msra.mxu0 %v264
    %294 = vmatprep.subr.mxu0 0.0
    %295 = vmatpush1.msra.mxu0 %v265
    %296 = vmatprep.subr.mxu0 0.0
    %297 = vmatpush1.msra.mxu0 %v266
    %298 = vmatprep.subr.mxu0 0.0
    %299 = vmatpush1.msra.mxu0 %v267
    %300 = vmatprep.subr.mxu0 0.0
    %301 = vmatpush1.msra.mxu0 %v268
    %302 = vmatprep.subr.mxu0 0.0
    %303 = vmatpush1.msra.mxu0 %v269
    %304 = vmatprep.subr.mxu0 0.0
    %305 = vmatpush1.msra.mxu0 %v270
    %306 = vmatprep.subr.mxu0 0.0
    %307 = vmatpush1.msra.mxu0 %v271
    %308 = vmatprep.subr.mxu0 0.0
    %309 = vmatpush1.msra.mxu0 %v272
    %310 = vmatprep.subr.mxu0 0.0
    %311 = vmatpush1.msra.mxu0 %v273
    %312 = vmatprep.subr.mxu0 0.0
    %313 = vmatpush1.msra.mxu0 %v274
    %314 = vmatprep.subr.mxu0 0.0
    %315 = vmatpush1.msra.mxu0 0.0
    %316 = vmatprep.subr.mxu0 0.0
    %317 = vmatpush1.msra.mxu0 0.0
    %318 = vmatprep.subr.mxu0 0.0
    %319 = vmatpush1.msra.mxu0 0.0
    %320 = vmatprep.subr.mxu0 0.0
    %321 = vmatpush1.msra.mxu0 0.0
    %322 = vmatprep.subr.mxu0 0.0
    %323 = vmatpush1.msra.mxu0 0.0
    %324 = vmatprep.subr.mxu0 0.0
    %325 = vmatpush1.msra.mxu0 0.0
    %326 = vmatprep.subr.mxu0 0.0
    %327 = vmatpush1.msra.mxu0 0.0
    %328 = vmatprep.subr.mxu0 0.0
    %329 = vmatpush1.msra.mxu0 0.0
    %330 = vmatprep.subr.mxu0 0.0
    %331 = vmatpush1.msra.mxu0 0.0
    %332 = vmatprep.subr.mxu0 0.0
    %333 = vmatpush1.msra.mxu0 0.0
    %334 = vmatprep.subr.mxu0 0.0
    %335 = vmatpush1.msra.mxu0 0.0
    %336 = vmatprep.subr.mxu0 0.0
    %337 = vmatpush1.msra.mxu0 0.0
    %338 = vmatprep.subr.mxu0 0.0
    %339 = vmatpush1.msra.mxu0 0.0
    %340 = vmatprep.subr.mxu0 0.0
    %341 = vmatpush1.msra.mxu0 0.0
    %342 = vmatprep.subr.mxu0 0.0
    %343 = vmatpush1.msra.mxu0 0.0
    %344 = vmatprep.subr.mxu0 0.0
    %345 = vmatpush1.msra.mxu0 0.0
    %346 = vmatprep.mubr.f32.mxu0 0.0
    %347 = vmatmul.mubr.f32.gmra.mrb[0].mxu0 %v258
    %v348 = vpop.f32.mrb[0].mxu0
    %v349 = vadd.f32 %v280, %v348
    %v350 = vpop.f32.mrb[0].mxu0
    %351 = vdwg.mxu0
    %vm352 = vcmask 7168
    %353 = vst.msk [vmem:[%s7] sm:$0xff] %vm352, %v349
    // Predicated region
    $region46: #{tpu_custom_call.1} parent=1 // pred_check
      _
    $region47: #{tpu_custom_call.1} parent=1 // pred_check_branch
      %355 = sbr.rel (0) target = $region49
    $region48: #{tpu_custom_call.1} parent=1 // pred_region
      _
    $region49: #{tpu_custom_call.1} parent=1 // pred_fallthru
      _
    // Predicated region
    $region50: #{tpu_custom_call.1} parent=1 // pred_check
      _
    $region51: #{tpu_custom_call.1} parent=1 // pred_check_branch
      %357 = sbr.rel (0) target = $region53
    $region52: #{tpu_custom_call.1} parent=1 // pred_region
      _
    $region53: #{tpu_custom_call.1} parent=1 // pred_fallthru
      _
    %358 = vsyncpa [#allocation3], 1
    %359 = vsyncpa [#allocation5], 1
    %360 = vsyncpa [#allocation8], 1

</llo_original>
